<compile_context>
chip_gen: v6e
topology: v6e:2x2x1
jax: 0.10.0
libtpu: 0.0.40
codegen_flags: <defaults>
</compile_context>

<pallas_src>
import jax
import jax.numpy as jnp
import numpy as np
from jax.experimental import pallas as pl
from jax.experimental.pallas import tpu as pltpu


def shift_kernel(x_ref, w_ref, o_ref):
    # x_ref: (B_TILE, T, TILE_D) block; w_ref: (3, TILE_D) taps (t-1, t, t+1);
    # o_ref: (B_TILE, T, TILE_D).
    x = x_ref[...]
    b, t, d = x.shape
    w0 = w_ref[0:1, :].reshape(1, 1, d)
    w1 = w_ref[1:2, :].reshape(1, 1, d)
    w2 = w_ref[2:3, :].reshape(1, 1, d)
    zrow = jnp.zeros((b, 1, d), dtype=x.dtype)
    # x_prev[:, t] = x[:, t-1] (zero at t=0); x_next[:, t] = x[:, t+1] (zero at t=T-1).
    x_prev = jnp.concatenate([zrow, x[:, :t - 1, :]], axis=1)
    x_next = jnp.concatenate([x[:, 1:, :], zrow], axis=1)
    o_ref[...] = w1 * x + w0 * x_prev + w2 * x_next


def make_shift_weights(input_channels, n_div=8, mode='shift', dtype=jnp.float32):
    """Deterministic Conv1d(C, C, k=3, groups=C, bias=False) weights, shape (C, 1, 3)."""
    fold = input_channels // n_div
    w = np.zeros((input_channels, 1, 3), dtype=np.float32)
    if mode == 'shift':
        w[:fold, 0, 2] = 1.0                        # shift left  (take t+1)
        w[fold:2 * fold, 0, 0] = 1.0                # shift right (take t-1)
        if 2 * fold < input_channels:
            w[2 * fold:, 0, 1] = 1.0                # identity
    return jnp.asarray(w, dtype=dtype)


def shift_module_forward(x, weight, n_segment=8, target_block_bytes=4 << 20):
    """x: (nt, c, h, w); weight: (c, 1, 3). Returns (nt, c, h, w)."""
    nt, c, h, w = x.shape
    assert nt % n_segment == 0, "nt must be a multiple of n_segment"
    n_batch = nt // n_segment
    T = n_segment
    D = c * h * w
    itemsize = jnp.dtype(x.dtype).itemsize

    # (nt, c, h, w) -> (n_batch, T, D); D flattening order is (c, h, w).
    x3 = x.reshape(n_batch, T, D)

    # Per-channel taps broadcast over the spatial part of D: (3, c) -> (3, c*h*w).
    taps = jnp.transpose(weight[:, 0, :], (1, 0)).astype(x.dtype)          # (3, c)
    taps_flat = jnp.broadcast_to(taps[:, :, None], (3, c, h * w)).reshape(3, D)

    # --- D (lane) tiling: multiple of 128, rebalanced so padding per tile < 128 lanes.
    d128 = pl.cdiv(D, 128) * 128
    tile_d_max = max(128, (target_block_bytes // (T * itemsize)) // 128 * 128)
    num_d_tiles = pl.cdiv(d128, tile_d_max)
    tile_d = pl.cdiv(pl.cdiv(d128, num_d_tiles), 128) * 128
    d_grid = num_d_tiles * tile_d

    # --- Batch folding: pick B_TILE so one block hits the byte target.
    row_bytes = T * tile_d * itemsize
    b_tile = int(min(n_batch, max(1, target_block_bytes // row_bytes)))
    num_b_tiles = pl.cdiv(n_batch, b_tile)

    # Megacore: ensure the grid has >= 2 blocks when possible (v7x has 2 TCs/chip).
    if num_d_tiles * num_b_tiles == 1 and n_batch >= 2:
        b_tile = pl.cdiv(n_batch, 2)
        num_b_tiles = pl.cdiv(n_batch, b_tile)

    # Only the tiny taps array is zero-padded (keeps dead lanes multiplying by 0).
    # x and the output stay unpadded: ragged edge blocks are handled by Pallas and
    # out-of-range output lanes are discarded -- no extra HBM passes.
    if d_grid != D:
        taps_flat = jnp.pad(taps_flat, ((0, 0), (0, d_grid - D)))

    # VMEM budget: double-buffered x + out + taps blocks, plus room for the
    # in-kernel stencil temporaries (x_prev / x_next), plus slack.
    block_bytes = b_tile * T * tile_d * itemsize
    taps_bytes = 3 * tile_d * itemsize
    vmem_limit = int(min(2 * (2 * block_bytes + taps_bytes) + 4 * block_bytes + (8 << 20),
                         100 << 20))

    out3 = pl.pallas_call(
        shift_kernel,
        out_shape=jax.ShapeDtypeStruct((n_batch, T, D), x.dtype),
        grid_spec=pltpu.PrefetchScalarGridSpec(
            num_scalar_prefetch=0,
            # Batch is the fastest (last) grid axis: the taps block index depends only
            # on the slow d axis, so taps are DMA'd once per D tile.
            grid=(num_d_tiles, num_b_tiles),
            in_specs=[
                pl.BlockSpec((b_tile, T, tile_d), lambda d, b: (b, 0, d)),
                pl.BlockSpec((3, tile_d), lambda d, b: (0, d)),
            ],
            out_specs=pl.BlockSpec((b_tile, T, tile_d), lambda d, b: (b, 0, d)),
        ),
        compiler_params=pltpu.CompilerParams(
            dimension_semantics=("parallel", "parallel"),
            vmem_limit_bytes=vmem_limit),
    )(x3, taps_flat)

    return out3.reshape(nt, c, h, w)


def reference_forward(x, weight, n_segment=8):
    """Pure-JAX reference of ShiftModule.forward (for verification)."""
    nt, c, h, w = x.shape
    n_batch = nt // n_segment
    x5 = x.reshape(n_batch, n_segment, c, h, w)
    zeros = jnp.zeros_like(x5[:, :1])
    x_prev = jnp.concatenate([zeros, x5[:, :-1]], axis=1)
    x_next = jnp.concatenate([x5[:, 1:], zeros], axis=1)
    w0 = weight[:, 0, 0][None, None, :, None, None]
    w1 = weight[:, 0, 1][None, None, :, None, None]
    w2 = weight[:, 0, 2][None, None, :, None, None]
    out = w0 * x_prev + w1 * x5 + w2 * x_next
    return out.reshape(nt, c, h, w)


if __name__ == "__main__":
    key = jax.random.PRNGKey(0)

    # Case 1: D = c*h*w is a multiple of 128 (exact-tile path).
    n_segment = 8
    n_batch = 2
    c, h, w = 8, 16, 16
    nt = n_batch * n_segment
    key, k1 = jax.random.split(key)
    x = jax.random.normal(k1, (nt, c, h, w), dtype=jnp.float32)
    weight = make_shift_weights(c, n_div=8, mode='shift')
    out = jax.block_until_ready(shift_module_forward(x, weight, n_segment=n_segment))
    ref = reference_forward(x, weight, n_segment=n_segment)
    assert out.shape == (nt, c, h, w)
    np.testing.assert_allclose(np.asarray(out), np.asarray(ref), rtol=1e-6, atol=1e-6)

    # Case 2: D not a multiple of 128 (exercises the ragged last-D-block path).
    c2, h2, w2 = 12, 7, 7            # D = 588
    key, k2 = jax.random.split(key)
    x2 = jax.random.normal(k2, (nt, c2, h2, w2), dtype=jnp.float32)
    weight2 = make_shift_weights(c2, n_div=8, mode='shift')
    out2 = jax.block_until_ready(shift_module_forward(x2, weight2, n_segment=n_segment))
    ref2 = reference_forward(x2, weight2, n_segment=n_segment)
    np.testing.assert_allclose(np.asarray(out2), np.asarray(ref2), rtol=1e-6, atol=1e-6)

    print("KERNEL_OK")
</pallas_src>

<mosaic_0001>
module attributes {stable_mosaic.version = 11 : i64} {
  func.func @shift_kernel(%arg0: i32, %arg1: i32, %arg2: memref<1x8x2048xf32, #tpu.memory_space<vmem>>, %arg3: memref<3x2048xf32, #tpu.memory_space<vmem>>, %arg4: memref<1x8x2048xf32, #tpu.memory_space<vmem>>) attributes {dimension_semantics = [#tpu.dimension_semantics<parallel>, #tpu.dimension_semantics<parallel>], iteration_bounds = array<i64: 1, 2>, scalar_prefetch = 0 : i64, scratch_operands = 0 : i64, tpu.core_type = #tpu.core_type<tc>, window_params = [{transform_indices = @transform_0, window_bounds = array<i64: 1, 8, 2048>}, {transform_indices = @transform_1, window_bounds = array<i64: 3, 2048>}, {transform_indices = @transform_2, window_bounds = array<i64: 1, 8, 2048>}]} {
    %c0 = arith.constant 0 : index
    %c0_0 = arith.constant 0 : index
    %c0_1 = arith.constant 0 : index
    %0 = vector.load %arg2[%c0, %c0_0, %c0_1] : memref<1x8x2048xf32, #tpu.memory_space<vmem>>, vector<1x8x2048xf32>
    %c0_2 = arith.constant 0 : index
    %c0_3 = arith.constant 0 : index
    %1 = vector.load %arg3[%c0_2, %c0_3] : memref<3x2048xf32, #tpu.memory_space<vmem>>, vector<1x2048xf32>
    %2 = vector.shape_cast %1 : vector<1x2048xf32> to vector<1x1x2048xf32>
    %c1 = arith.constant 1 : index
    %c0_4 = arith.constant 0 : index
    %3 = vector.load %arg3[%c1, %c0_4] : memref<3x2048xf32, #tpu.memory_space<vmem>>, vector<1x2048xf32>
    %4 = vector.shape_cast %3 : vector<1x2048xf32> to vector<1x1x2048xf32>
    %c2 = arith.constant 2 : index
    %c0_5 = arith.constant 0 : index
    %5 = vector.load %arg3[%c2, %c0_5] : memref<3x2048xf32, #tpu.memory_space<vmem>>, vector<1x2048xf32>
    %6 = vector.shape_cast %5 : vector<1x2048xf32> to vector<1x1x2048xf32>
    %cst = arith.constant 0.000000e+00 : f32
    %7 = vector.broadcast %cst : f32 to vector<1x1x2048xf32>
    %8 = vector.extract_strided_slice %0 {offsets = [0, 0, 0], sizes = [1, 7, 2048], strides = [1, 1, 1]} : vector<1x8x2048xf32> to vector<1x7x2048xf32>
    %9 = tpu.concatenate %7, %8 in 1 : vector<1x1x2048xf32>, vector<1x7x2048xf32> -> vector<1x8x2048xf32>
    %10 = vector.extract_strided_slice %0 {offsets = [0, 1, 0], sizes = [1, 7, 2048], strides = [1, 1, 1]} : vector<1x8x2048xf32> to vector<1x7x2048xf32>
    %11 = tpu.concatenate %10, %7 in 1 : vector<1x7x2048xf32>, vector<1x1x2048xf32> -> vector<1x8x2048xf32>
    %12 = vector.broadcast %4 : vector<1x1x2048xf32> to vector<1x8x2048xf32>
    %13 = arith.mulf %12, %0 : vector<1x8x2048xf32>
    %14 = vector.broadcast %2 : vector<1x1x2048xf32> to vector<1x8x2048xf32>
    %15 = arith.mulf %14, %9 : vector<1x8x2048xf32>
    %16 = arith.addf %13, %15 : vector<1x8x2048xf32>
    %17 = vector.broadcast %6 : vector<1x1x2048xf32> to vector<1x8x2048xf32>
    %18 = arith.mulf %17, %11 : vector<1x8x2048xf32>
    %19 = arith.addf %16, %18 : vector<1x8x2048xf32>
    %c0_6 = arith.constant 0 : index
    %c0_7 = arith.constant 0 : index
    %c0_8 = arith.constant 0 : index
    %20 = vector.load %arg4[%c0_6, %c0_7, %c0_8] : memref<1x8x2048xf32, #tpu.memory_space<vmem>>, vector<1x8x2048xf32>
    tpu.vector_store %arg4[%c0_6, %c0_7, %c0_8], %19 {strides = array<i32>} : memref<1x8x2048xf32, #tpu.memory_space<vmem>>, vector<1x8x2048xf32>,
    return
  }
  func.func @transform_0(%arg0: i32, %arg1: i32) -> (i32, i32, i32) {
    %c0_i32 = arith.constant 0 : i32
    %c0_i32_0 = arith.constant 0 : i32
    return %arg1, %c0_i32, %arg0 : i32, i32, i32
  }
  func.func @transform_1(%arg0: i32, %arg1: i32) -> (i32, i32) {
    %c0_i32 = arith.constant 0 : i32
    %c0_i32_0 = arith.constant 0 : i32
    return %c0_i32, %arg0 : i32, i32
  }
  func.func @transform_2(%arg0: i32, %arg1: i32) -> (i32, i32, i32) {
    %c0_i32 = arith.constant 0 : i32
    %c0_i32_0 = arith.constant 0 : i32
    return %arg1, %c0_i32, %arg0 : i32, i32, i32
  }
}

</mosaic_0001>

<llo_original>
// kernel: tpu_custom_call.1
$region0: #{tpu_custom_call.1}
  #allocation0 [shape = 'u32[]', space=smem, size = 0x4, offset = 0x4, fixed_abs, tag = 'smem constant byte address 0x4 - core index']
  #allocation1 [shape = 'u32[144,128]{1,0:T(1,128)}', space=vmem, size = 0x12000, scoped, tag = 'internal scratch']
  %s0 = inlined_call_operand.hbm [shape: f32[2,8,2048], index: 0, kind: input, shape index: {}]
  %s1 = inlined_call_operand.hbm [shape: f32[3,2048], index: 1, kind: input, shape index: {}]
  %s2 = inlined_call_operand.hbm [shape: f32[2,8,2048], index: 2, kind: output, shape index: {}]
  %s3 = sld [smem:[#allocation0]]
  $region49: #{tpu_custom_call.1} parent=0
    _
  %s5 = ssub.s32 1, %s3
  %s6 = scalar_select 0, %s5, %s3
  $region1: #{tpu_custom_call.1} parent=0
    #allocation2 [shape = 'u8[131072]{0}', space=vmem, size = 0x20000, scoped, tag = 'input window, operand 0']
    #allocation3 [shape = 's32[2]{0}', space=sflag, size = 0x8, scoped, tag = 'scoped memory for tpu_custom_call.1']
    #allocation4 [shape = 's32[2]{0}', space=sflag, size = 0x8, scoped, tag = 'scoped memory for tpu_custom_call.1']
    #allocation5 [shape = 'u8[32768]{0}', space=vmem, size = 0x8000, scoped, tag = 'input window, operand 1, single buffered']
    #allocation6 [shape = 's32[1]{0}', space=sflag, size = 0x4, scoped, tag = 'scoped memory for tpu_custom_call.1']
    #allocation7 [shape = 'u8[131072]{0}', space=vmem, size = 0x20000, scoped, tag = 'output window, operand 0']
    %7 = vsyncpa [#allocation3], 0
    %s8 = scalar_lea.sflag [#allocation3], 1
    %9 = vsyncpa %s8, 0
    %10 = vsyncpa [#allocation6], 0
    %11 = vsyncpa [#allocation4], 0
    %s12 = scalar_lea.sflag [#allocation4], 1
    %13 = vsyncpa %s12, 0
    loop: start=0, step=1, limit=4
    $region2: #{tpu_custom_call.1} parent=1 // loop_pre_header
      _
    $region3: #{tpu_custom_call.1} parent=1 // loop_header
      %s15 = sphi 0, %s19
      %p16 = scmp.ge.s32.totalorder %s15, 4
      %s22 = sphi 0, %s34
      %s23 = sphi 0, %s30
      %s24 = sphi 0, %s22
      %s25 = sphi 0, %s23
      %s26 = sphi 0, %s24
      %s27 = sphi 0, %s25
      %s39 = sphi 0, %s41
      %s42 = sphi 0, %s39
      %s43 = sphi 0, %s42
      %s59 = sphi 0, %s43
      %s65 = sphi 0, %s67
      %s68 = sphi 0, %s65
      %s69 = sphi 0, %s68
      %s85 = sphi 0, %s69
      %s93 = sphi 0, %s95
      %s96 = sphi 0, %s93
      %s97 = sphi 0, %s96
      %s113 = sphi 0, %s97
    $region4: #{tpu_custom_call.1} parent=1 // loop_header_branch
      %18 = sbr.rel (%p16) target = $region8
    $region5: #{tpu_custom_call.1} parent=1 // loop_body
      %s20 = ssub.s32 %s15, 1
      %s21 = ssub.s32 %s15, 2
      %s28 = sadd.s32 1, %s23
      %p29 = scmp.ge.s32.totalorder %s28, 2
      %s30 = scalar_select %p29, 0, %s28
      %s31 = sadd.s32 1, %s22
      %s32 = scalar_select %p29, %s31, %s22
      %p33 = scmp.ge.s32.totalorder %s32, 1
      %s34 = scalar_select %p33, 0, %s32
      %s35 = ssub.s32 %s23, %s30
      %s36 = ssub.s32 %s22, %s34
      %s37 = sor.u32 %s35, %s36
      %p38 = scmp.eq.s32.totalorder %s37, 0
      %s40 = sadd.s32 %s39, 1
      %s41 = scalar_select %p38, %s39, %s40
      %p44 = pneg %p38
      %p45 = scmp.eq.s32.totalorder %s15, 1
      %p46 = por %p44, %p45
      %p47 = scmp.ne.s32.totalorder %s39, %s42
      %p48 = scmp.eq.s32.totalorder %s15, 0
      %p49 = por %p47, %p48
      %p50 = scmp.ne.s32.totalorder %s39, %s42
      %p51 = scmp.eq.s32.totalorder %s20, 1
      %p52 = por %p50, %p51
      %p53 = scmp.ne.s32.totalorder %s42, %s43
      %p54 = scmp.eq.s32.totalorder %s20, 0
      %p55 = por %p53, %p54
      %p56 = scmp.ne.s32.totalorder %s42, %s43
      %p57 = scmp.eq.s32.totalorder %s21, 1
      %p58 = por %p56, %p57
      %p60 = scmp.ne.s32.totalorder %s43, %s59
      %p61 = scmp.eq.s32.totalorder %s21, 0
      %p62 = por %p60, %p61
      %s63 = ssub.s32 %s22, %s34
      %p64 = scmp.eq.s32.totalorder %s63, 0
      %s66 = sadd.s32 %s65, 1
      %s67 = scalar_select %p64, %s65, %s66
      %p70 = pneg %p64
      %p71 = scmp.eq.s32.totalorder %s15, 1
      %p72 = por %p70, %p71
      %p73 = scmp.ne.s32.totalorder %s65, %s68
      %p74 = scmp.eq.s32.totalorder %s15, 0
      %p75 = por %p73, %p74
      %p76 = scmp.ne.s32.totalorder %s65, %s68
      %p77 = scmp.eq.s32.totalorder %s20, 1
      %p78 = por %p76, %p77
      %p79 = scmp.ne.s32.totalorder %s68, %s69
      %p80 = scmp.eq.s32.totalorder %s20, 0
      %p81 = por %p79, %p80
      %p82 = scmp.ne.s32.totalorder %s68, %s69
      %p83 = scmp.eq.s32.totalorder %s21, 1
      %p84 = por %p82, %p83
      %p86 = scmp.ne.s32.totalorder %s69, %s85
      %p87 = scmp.eq.s32.totalorder %s21, 0
      %p88 = por %p86, %p87
      %s89 = ssub.s32 %s23, %s30
      %s90 = ssub.s32 %s22, %s34
      %s91 = sor.u32 %s89, %s90
      %p92 = scmp.eq.s32.totalorder %s91, 0
      %s94 = sadd.s32 %s93, 1
      %s95 = scalar_select %p92, %s93, %s94
      %p98 = pneg %p92
      %p99 = scmp.eq.s32.totalorder %s15, 1
      %p100 = por %p98, %p99
      %p101 = scmp.ne.s32.totalorder %s93, %s96
      %p102 = scmp.eq.s32.totalorder %s15, 0
      %p103 = por %p101, %p102
      %p104 = scmp.ne.s32.totalorder %s93, %s96
      %p105 = scmp.eq.s32.totalorder %s20, 1
      %p106 = por %p104, %p105
      %p107 = scmp.ne.s32.totalorder %s96, %s97
      %p108 = scmp.eq.s32.totalorder %s20, 0
      %p109 = por %p107, %p108
      %p110 = scmp.ne.s32.totalorder %s96, %s97
      %p111 = scmp.eq.s32.totalorder %s21, 1
      %p112 = por %p110, %p111
      %p114 = scmp.ne.s32.totalorder %s97, %s113
      %p115 = scmp.eq.s32.totalorder %s21, 0
      %p116 = por %p114, %p115
      %p117 = scmp.le.s32.totalorder 1, %s15
      %p118 = scmp.lt.s32.totalorder %s15, 3
      %p119 = pnand %p117, %p118
      %p120 = pneg %p119
      // Predicated region
      $region9: #{tpu_custom_call.1} parent=5 // pred_check
        _
      $region10: #{tpu_custom_call.1} parent=5 // pred_check_branch
        %122 = sbr.rel (%p119) target = $region12
      $region11: #{tpu_custom_call.1} parent=5 // pred_region
        %s123 = ssub.s32 %s15, 1
        // Predicated region
        $region13: #{tpu_custom_call.1} parent=11 // pred_check
          %p124 = pneg %p81
        $region14: #{tpu_custom_call.1} parent=11 // pred_check_branch
          %126 = sbr.rel (%p124) target = $region16
        $region15: #{tpu_custom_call.1} parent=11 // pred_region
          %s127 = smul.u32 16, %s24
          %s129 = ssub.s32 1024, 1024
          %130 = vsyncadd [#allocation6], %s129
          %s131 = smul.addr %s127, 64
          %s132 = scalar_lea.hbm %s1, %s131
          %s134 = sshll.u32 [#allocation5], 4
          %s135 = int_to_ptr.vmem [resolvable:$true] %s134
          %137 = dma.hbm_to_vmem [thread:$0]  %s132, 1024, %s135, [#allocation6]
        $region16: #{tpu_custom_call.1} parent=11 // pred_fallthru
          _
      $region12: #{tpu_custom_call.1} parent=5 // pred_fallthru
        _
      %p138 = scmp.lt.s32.totalorder %s15, 2
      // Predicated region
      $region17: #{tpu_custom_call.1} parent=5 // pred_check
        %p139 = pneg %p138
      $region18: #{tpu_custom_call.1} parent=5 // pred_check_branch
        %141 = sbr.rel (%p139) target = $region20
      $region19: #{tpu_custom_call.1} parent=5 // pred_region
        // Predicated region
        $region21: #{tpu_custom_call.1} parent=19 // pred_check
          %p142 = pneg %p49
        $region22: #{tpu_custom_call.1} parent=19 // pred_check_branch
          %144 = sbr.rel (%p142) target = $region24
        $region23: #{tpu_custom_call.1} parent=19 // pred_region
          %s145 = sand.u32 %s39, 1
          %s146 = scalar_lea.sflag [#allocation3], %s145
          %s147 = sand.u32 %s39, 1
          %s148 = smul.addr %s147, 128
          %s149 = scalar_lea.vmem [#allocation2], %s148
          %s150 = smul.u32 16, %s22
          %s152 = ssub.s32 2048, 2048
          %153 = vsyncadd %s146, %s152
          %s154 = smul.addr %s23, 16
          %s155 = sadd.s32 %s150, %s154
          %s156 = smul.addr %s155, 128
          %s157 = scalar_lea.hbm %s0, %s156
          %s159 = sshll.u32 %s149, 4
          %s160 = int_to_ptr.vmem [resolvable:$true] %s159
          %162 = dma.hbm_to_vmem [thread:$0]  %s157, 2048, %s160, %s146
        $region24: #{tpu_custom_call.1} parent=19 // pred_fallthru
          _
      $region20: #{tpu_custom_call.1} parent=5 // pred_fallthru
        _
      %p163 = scmp.le.s32.totalorder 1, %s15
      %p164 = scmp.lt.s32.totalorder %s15, 3
      %p165 = pnand %p163, %p164
      %p166 = pneg %p165
      // Predicated region
      $region25: #{tpu_custom_call.1} parent=5 // pred_check
        _
      $region26: #{tpu_custom_call.1} parent=5 // pred_check_branch
        %168 = sbr.rel (%p165) target = $region28
      $region27: #{tpu_custom_call.1} parent=5 // pred_region
        %s169 = ssub.s32 %s15, 1
        %s170 = sand.u32 %s42, 1
        %s171 = scalar_lea.sflag [#allocation3], %s170
        %s172 = sand.u32 %s42, 1
        %s173 = smul.addr %s172, 128
        %s174 = scalar_lea.vmem [#allocation2], %s173
        // Predicated region
        $region29: #{tpu_custom_call.1} parent=27 // pred_check
          %p175 = pneg %p55
        $region30: #{tpu_custom_call.1} parent=27 // pred_check_branch
          %177 = sbr.rel (%p175) target = $region32
        $region31: #{tpu_custom_call.1} parent=27 // pred_region
          %178 = dma.done %s171, 2048
        $region32: #{tpu_custom_call.1} parent=27 // pred_fallthru
          _
        // Predicated region
        $region33: #{tpu_custom_call.1} parent=27 // pred_check
          %p179 = pneg %p81
        $region34: #{tpu_custom_call.1} parent=27 // pred_check_branch
          %181 = sbr.rel (%p179) target = $region36
        $region35: #{tpu_custom_call.1} parent=27 // pred_region
          %182 = dma.done [#allocation6], 1024
        $region36: #{tpu_custom_call.1} parent=27 // pred_fallthru
          _
        %s183 = sand.u32 %s42, 1
        %s184 = scalar_lea.sflag [#allocation3], %s183
        %s185 = sand.u32 %s42, 1
        %s186 = smul.addr %s185, 128
        %s187 = scalar_lea.vmem [#allocation2], %s186
        %p188 = pneg %p55
        %p189 = pneg %p52
        %p190 = pneg %p81
        %p191 = pneg %p78
        %p192 = pneg %p109
        %p193 = pneg %p106
        %s194 = sand.u32 %s96, 1
        %s195 = scalar_lea.sflag [#allocation4], %s194
        %s196 = sand.u32 %s96, 1
        %s197 = smul.addr %s196, 128
        %s198 = scalar_lea.vmem [#allocation7], %s197
        %s199 = smul.u32 16, %s24
        %s200 = smul.u32 16, %s24
        %s201 = smul.u32 16, %s24
        %v202 = vld [vmem:[%s174] sm:$0xff]
        %v203 = vld [vmem:[%s174 + $0x8] sm:$0xff]
        %v204 = vld [vmem:[%s174 + $0x10] sm:$0xff]
        %v205 = vld [vmem:[%s174 + $0x18] sm:$0xff]
        %v206 = vld [vmem:[%s174 + $0x20] sm:$0xff]
        %v207 = vld [vmem:[%s174 + $0x28] sm:$0xff]
        %v208 = vld [vmem:[%s174 + $0x30] sm:$0xff]
        %v209 = vld [vmem:[%s174 + $0x38] sm:$0xff]
        %v210 = vld [vmem:[%s174 + $0x40] sm:$0xff]
        %v211 = vld [vmem:[%s174 + $0x48] sm:$0xff]
        %v212 = vld [vmem:[%s174 + $0x50] sm:$0xff]
        %v213 = vld [vmem:[%s174 + $0x58] sm:$0xff]
        %v214 = vld [vmem:[%s174 + $0x60] sm:$0xff]
        %v215 = vld [vmem:[%s174 + $0x68] sm:$0xff]
        %v216 = vld [vmem:[%s174 + $0x70] sm:$0xff]
        %v217 = vld [vmem:[%s174 + $0x78] sm:$0xff]
        %v218 = vld [vmem:[#allocation5] ss:$4 sm:$0xff]
        %s219 = scalar_lea.vmem [#allocation5], 32
        %v220 = vld [vmem:[%s219] ss:$4 sm:$0xff]
        %s221 = scalar_lea.vmem [#allocation5], 1
        %v222 = vld [vmem:[%s221] ss:$4 sm:$0xff]
        %s223 = scalar_lea.vmem [#allocation5], 33
        %v224 = vld [vmem:[%s223] ss:$4 sm:$0xff]
        %s225 = scalar_lea.vmem [#allocation5], 2
        %v226 = vld [vmem:[%s225] ss:$4 sm:$0xff]
        %s227 = scalar_lea.vmem [#allocation5], 34
        %v228 = vld [vmem:[%s227] ss:$4 sm:$0xff]
        %v245 = vrot.slane %v202, 7
        %v246 = vrot.slane %v203, 7
        %v247 = vrot.slane %v204, 7
        %v248 = vrot.slane %v205, 7
        %v249 = vrot.slane %v206, 7
        %v250 = vrot.slane %v207, 7
        %v251 = vrot.slane %v208, 7
        %v252 = vrot.slane %v209, 7
        %v253 = vrot.slane %v210, 7
        %v254 = vrot.slane %v211, 7
        %v255 = vrot.slane %v212, 7
        %v256 = vrot.slane %v213, 7
        %v257 = vrot.slane %v214, 7
        %v258 = vrot.slane %v215, 7
        %v259 = vrot.slane %v216, 7
        %v260 = vrot.slane %v217, 7
        %vm277 = vcmask 1040384
        %v278 = vsel %vm277, 0.0, %v245
        %v279 = vsel %vm277, 0.0, %v246
        %v280 = vsel %vm277, 0.0, %v247
        %v281 = vsel %vm277, 0.0, %v248
        %v282 = vsel %vm277, 0.0, %v249
        %v283 = vsel %vm277, 0.0, %v250
        %v284 = vsel %vm277, 0.0, %v251
        %v285 = vsel %vm277, 0.0, %v252
        %v286 = vsel %vm277, 0.0, %v253
        %v287 = vsel %vm277, 0.0, %v254
        %v288 = vsel %vm277, 0.0, %v255
        %v289 = vsel %vm277, 0.0, %v256
        %v290 = vsel %vm277, 0.0, %v257
        %v291 = vsel %vm277, 0.0, %v258
        %v292 = vsel %vm277, 0.0, %v259
        %v293 = vsel %vm277, 0.0, %v260
        %v294 = vrot.slane %v202, 1
        %v295 = vrot.slane %v203, 1
        %v296 = vrot.slane %v204, 1
        %v297 = vrot.slane %v205, 1
        %v298 = vrot.slane %v206, 1
        %v299 = vrot.slane %v207, 1
        %v300 = vrot.slane %v208, 1
        %v301 = vrot.slane %v209, 1
        %v302 = vrot.slane %v210, 1
        %v303 = vrot.slane %v211, 1
        %v304 = vrot.slane %v212, 1
        %v305 = vrot.slane %v213, 1
        %v306 = vrot.slane %v214, 1
        %v307 = vrot.slane %v215, 1
        %v308 = vrot.slane %v216, 1
        %v309 = vrot.slane %v217, 1
        %vm326 = vcmask 1046528
        %v327 = vsel %vm326, %v294, 0.0
        %v328 = vsel %vm326, %v295, 0.0
        %v329 = vsel %vm326, %v296, 0.0
        %v330 = vsel %vm326, %v297, 0.0
        %v331 = vsel %vm326, %v298, 0.0
        %v332 = vsel %vm326, %v299, 0.0
        %v333 = vsel %vm326, %v300, 0.0
        %v334 = vsel %vm326, %v301, 0.0
        %v335 = vsel %vm326, %v302, 0.0
        %v336 = vsel %vm326, %v303, 0.0
        %v337 = vsel %vm326, %v304, 0.0
        %v338 = vsel %vm326, %v305, 0.0
        %v339 = vsel %vm326, %v306, 0.0
        %v340 = vsel %vm326, %v307, 0.0
        %v341 = vsel %vm326, %v308, 0.0
        %v342 = vsel %vm326, %v309, 0.0
        %v345 = vlaneseq
        %v346 = vshrl.u32 %v345, 7
        %v347 = vsub.s32 0, %v346
        %v348 = vrot.slane %v222, %v347
        %v349 = vlaneseq
        %v350 = vshrl.u32 %v349, 7
        %v351 = vsub.s32 1, %v350
        %v352 = vrot.slane %v222, %v351
        %v353 = vlaneseq
        %v354 = vshrl.u32 %v353, 7
        %v355 = vsub.s32 2, %v354
        %v356 = vrot.slane %v222, %v355
        %v357 = vlaneseq
        %v358 = vshrl.u32 %v357, 7
        %v359 = vsub.s32 3, %v358
        %v360 = vrot.slane %v222, %v359
        %v361 = vlaneseq
        %v362 = vshrl.u32 %v361, 7
        %v363 = vsub.s32 4, %v362
        %v364 = vrot.slane %v222, %v363
        %v365 = vlaneseq
        %v366 = vshrl.u32 %v365, 7
        %v367 = vsub.s32 5, %v366
        %v368 = vrot.slane %v222, %v367
        %v369 = vlaneseq
        %v370 = vshrl.u32 %v369, 7
        %v371 = vsub.s32 6, %v370
        %v372 = vrot.slane %v222, %v371
        %v373 = vlaneseq
        %v374 = vshrl.u32 %v373, 7
        %v375 = vsub.s32 7, %v374
        %v376 = vrot.slane %v222, %v375
        %v377 = vlaneseq
        %v378 = vshrl.u32 %v377, 7
        %v379 = vsub.s32 0, %v378
        %v380 = vrot.slane %v224, %v379
        %v381 = vlaneseq
        %v382 = vshrl.u32 %v381, 7
        %v383 = vsub.s32 1, %v382
        %v384 = vrot.slane %v224, %v383
        %v385 = vlaneseq
        %v386 = vshrl.u32 %v385, 7
        %v387 = vsub.s32 2, %v386
        %v388 = vrot.slane %v224, %v387
        %v389 = vlaneseq
        %v390 = vshrl.u32 %v389, 7
        %v391 = vsub.s32 3, %v390
        %v392 = vrot.slane %v224, %v391
        %v393 = vlaneseq
        %v394 = vshrl.u32 %v393, 7
        %v395 = vsub.s32 4, %v394
        %v396 = vrot.slane %v224, %v395
        %v397 = vlaneseq
        %v398 = vshrl.u32 %v397, 7
        %v399 = vsub.s32 5, %v398
        %v400 = vrot.slane %v224, %v399
        %v401 = vlaneseq
        %v402 = vshrl.u32 %v401, 7
        %v403 = vsub.s32 6, %v402
        %v404 = vrot.slane %v224, %v403
        %v405 = vlaneseq
        %v406 = vshrl.u32 %v405, 7
        %v407 = vsub.s32 7, %v406
        %v408 = vrot.slane %v224, %v407
        %v425 = vmul.f32 %v348, %v202
        %v426 = vmul.f32 %v352, %v203
        %v427 = vmul.f32 %v356, %v204
        %v428 = vmul.f32 %v360, %v205
        %v429 = vmul.f32 %v364, %v206
        %v430 = vmul.f32 %v368, %v207
        %v431 = vmul.f32 %v372, %v208
        %v432 = vmul.f32 %v376, %v209
        %v433 = vmul.f32 %v380, %v210
        %v434 = vmul.f32 %v384, %v211
        %v435 = vmul.f32 %v388, %v212
        %v436 = vmul.f32 %v392, %v213
        %v437 = vmul.f32 %v396, %v214
        %v438 = vmul.f32 %v400, %v215
        %v439 = vmul.f32 %v404, %v216
        %v440 = vmul.f32 %v408, %v217
        %v443 = vlaneseq
        %v444 = vshrl.u32 %v443, 7
        %v445 = vsub.s32 0, %v444
        %v446 = vrot.slane %v218, %v445
        %v447 = vlaneseq
        %v448 = vshrl.u32 %v447, 7
        %v449 = vsub.s32 1, %v448
        %v450 = vrot.slane %v218, %v449
        %v451 = vlaneseq
        %v452 = vshrl.u32 %v451, 7
        %v453 = vsub.s32 2, %v452
        %v454 = vrot.slane %v218, %v453
        %v455 = vlaneseq
        %v456 = vshrl.u32 %v455, 7
        %v457 = vsub.s32 3, %v456
        %v458 = vrot.slane %v218, %v457
        %v459 = vlaneseq
        %v460 = vshrl.u32 %v459, 7
        %v461 = vsub.s32 4, %v460
        %v462 = vrot.slane %v218, %v461
        %v463 = vlaneseq
        %v464 = vshrl.u32 %v463, 7
        %v465 = vsub.s32 5, %v464
        %v466 = vrot.slane %v218, %v465
        %v467 = vlaneseq
        %v468 = vshrl.u32 %v467, 7
        %v469 = vsub.s32 6, %v468
        %v470 = vrot.slane %v218, %v469
        %v471 = vlaneseq
        %v472 = vshrl.u32 %v471, 7
        %v473 = vsub.s32 7, %v472
        %v474 = vrot.slane %v218, %v473
        %v475 = vlaneseq
        %v476 = vshrl.u32 %v475, 7
        %v477 = vsub.s32 0, %v476
        %v478 = vrot.slane %v220, %v477
        %v479 = vlaneseq
        %v480 = vshrl.u32 %v479, 7
        %v481 = vsub.s32 1, %v480
        %v482 = vrot.slane %v220, %v481
        %v483 = vlaneseq
        %v484 = vshrl.u32 %v483, 7
        %v485 = vsub.s32 2, %v484
        %v486 = vrot.slane %v220, %v485
        %v487 = vlaneseq
        %v488 = vshrl.u32 %v487, 7
        %v489 = vsub.s32 3, %v488
        %v490 = vrot.slane %v220, %v489
        %v491 = vlaneseq
        %v492 = vshrl.u32 %v491, 7
        %v493 = vsub.s32 4, %v492
        %v494 = vrot.slane %v220, %v493
        %v495 = vlaneseq
        %v496 = vshrl.u32 %v495, 7
        %v497 = vsub.s32 5, %v496
        %v498 = vrot.slane %v220, %v497
        %v499 = vlaneseq
        %v500 = vshrl.u32 %v499, 7
        %v501 = vsub.s32 6, %v500
        %v502 = vrot.slane %v220, %v501
        %v503 = vlaneseq
        %v504 = vshrl.u32 %v503, 7
        %v505 = vsub.s32 7, %v504
        %v506 = vrot.slane %v220, %v505
        %v523 = vmul.f32 %v446, %v278
        %v524 = vmul.f32 %v450, %v279
        %v525 = vmul.f32 %v454, %v280
        %v526 = vmul.f32 %v458, %v281
        %v527 = vmul.f32 %v462, %v282
        %v528 = vmul.f32 %v466, %v283
        %v529 = vmul.f32 %v470, %v284
        %v530 = vmul.f32 %v474, %v285
        %v531 = vmul.f32 %v478, %v286
        %v532 = vmul.f32 %v482, %v287
        %v533 = vmul.f32 %v486, %v288
        %v534 = vmul.f32 %v490, %v289
        %v535 = vmul.f32 %v494, %v290
        %v536 = vmul.f32 %v498, %v291
        %v537 = vmul.f32 %v502, %v292
        %v538 = vmul.f32 %v506, %v293
        %v539 = vadd.f32 %v425, %v523
        %v540 = vadd.f32 %v426, %v524
        %v541 = vadd.f32 %v427, %v525
        %v542 = vadd.f32 %v428, %v526
        %v543 = vadd.f32 %v429, %v527
        %v544 = vadd.f32 %v430, %v528
        %v545 = vadd.f32 %v431, %v529
        %v546 = vadd.f32 %v432, %v530
        %v547 = vadd.f32 %v433, %v531
        %v548 = vadd.f32 %v434, %v532
        %v549 = vadd.f32 %v435, %v533
        %v550 = vadd.f32 %v436, %v534
        %v551 = vadd.f32 %v437, %v535
        %v552 = vadd.f32 %v438, %v536
        %v553 = vadd.f32 %v439, %v537
        %v554 = vadd.f32 %v440, %v538
        %v557 = vlaneseq
        %v558 = vshrl.u32 %v557, 7
        %v559 = vsub.s32 0, %v558
        %v560 = vrot.slane %v226, %v559
        %v561 = vlaneseq
        %v562 = vshrl.u32 %v561, 7
        %v563 = vsub.s32 1, %v562
        %v564 = vrot.slane %v226, %v563
        %v565 = vlaneseq
        %v566 = vshrl.u32 %v565, 7
        %v567 = vsub.s32 2, %v566
        %v568 = vrot.slane %v226, %v567
        %v569 = vlaneseq
        %v570 = vshrl.u32 %v569, 7
        %v571 = vsub.s32 3, %v570
        %v572 = vrot.slane %v226, %v571
        %v573 = vlaneseq
        %v574 = vshrl.u32 %v573, 7
        %v575 = vsub.s32 4, %v574
        %v576 = vrot.slane %v226, %v575
        %v577 = vlaneseq
        %v578 = vshrl.u32 %v577, 7
        %v579 = vsub.s32 5, %v578
        %v580 = vrot.slane %v226, %v579
        %v581 = vlaneseq
        %v582 = vshrl.u32 %v581, 7
        %v583 = vsub.s32 6, %v582
        %v584 = vrot.slane %v226, %v583
        %v585 = vlaneseq
        %v586 = vshrl.u32 %v585, 7
        %v587 = vsub.s32 7, %v586
        %v588 = vrot.slane %v226, %v587
        %v589 = vlaneseq
        %v590 = vshrl.u32 %v589, 7
        %v591 = vsub.s32 0, %v590
        %v592 = vrot.slane %v228, %v591
        %v593 = vlaneseq
        %v594 = vshrl.u32 %v593, 7
        %v595 = vsub.s32 1, %v594
        %v596 = vrot.slane %v228, %v595
        %v597 = vlaneseq
        %v598 = vshrl.u32 %v597, 7
        %v599 = vsub.s32 2, %v598
        %v600 = vrot.slane %v228, %v599
        %v601 = vlaneseq
        %v602 = vshrl.u32 %v601, 7
        %v603 = vsub.s32 3, %v602
        %v604 = vrot.slane %v228, %v603
        %v605 = vlaneseq
        %v606 = vshrl.u32 %v605, 7
        %v607 = vsub.s32 4, %v606
        %v608 = vrot.slane %v228, %v607
        %v609 = vlaneseq
        %v610 = vshrl.u32 %v609, 7
        %v611 = vsub.s32 5, %v610
        %v612 = vrot.slane %v228, %v611
        %v613 = vlaneseq
        %v614 = vshrl.u32 %v613, 7
        %v615 = vsub.s32 6, %v614
        %v616 = vrot.slane %v228, %v615
        %v617 = vlaneseq
        %v618 = vshrl.u32 %v617, 7
        %v619 = vsub.s32 7, %v618
        %v620 = vrot.slane %v228, %v619
        %v637 = vmul.f32 %v560, %v327
        %v638 = vmul.f32 %v564, %v328
        %v639 = vmul.f32 %v568, %v329
        %v640 = vmul.f32 %v572, %v330
        %v641 = vmul.f32 %v576, %v331
        %v642 = vmul.f32 %v580, %v332
        %v643 = vmul.f32 %v584, %v333
        %v644 = vmul.f32 %v588, %v334
        %v645 = vmul.f32 %v592, %v335
        %v646 = vmul.f32 %v596, %v336
        %v647 = vmul.f32 %v600, %v337
        %v648 = vmul.f32 %v604, %v338
        %v649 = vmul.f32 %v608, %v339
        %v650 = vmul.f32 %v612, %v340
        %v651 = vmul.f32 %v616, %v341
        %v652 = vmul.f32 %v620, %v342
        %v653 = vadd.f32 %v539, %v637
        %v654 = vadd.f32 %v540, %v638
        %v655 = vadd.f32 %v541, %v639
        %v656 = vadd.f32 %v542, %v640
        %v657 = vadd.f32 %v543, %v641
        %v658 = vadd.f32 %v544, %v642
        %v659 = vadd.f32 %v545, %v643
        %v660 = vadd.f32 %v546, %v644
        %v661 = vadd.f32 %v547, %v645
        %v662 = vadd.f32 %v548, %v646
        %v663 = vadd.f32 %v549, %v647
        %v664 = vadd.f32 %v550, %v648
        %v665 = vadd.f32 %v551, %v649
        %v666 = vadd.f32 %v552, %v650
        %v667 = vadd.f32 %v553, %v651
        %v668 = vadd.f32 %v554, %v652
        %669 = vst [vmem:[%s198] sm:$0xff] %v653
        %670 = vst [vmem:[%s198 + $0x8] sm:$0xff] %v654
        %671 = vst [vmem:[%s198 + $0x10] sm:$0xff] %v655
        %672 = vst [vmem:[%s198 + $0x18] sm:$0xff] %v656
        %673 = vst [vmem:[%s198 + $0x20] sm:$0xff] %v657
        %674 = vst [vmem:[%s198 + $0x28] sm:$0xff] %v658
        %675 = vst [vmem:[%s198 + $0x30] sm:$0xff] %v659
        %676 = vst [vmem:[%s198 + $0x38] sm:$0xff] %v660
        %677 = vst [vmem:[%s198 + $0x40] sm:$0xff] %v661
        %678 = vst [vmem:[%s198 + $0x48] sm:$0xff] %v662
        %679 = vst [vmem:[%s198 + $0x50] sm:$0xff] %v663
        %680 = vst [vmem:[%s198 + $0x58] sm:$0xff] %v664
        %681 = vst [vmem:[%s198 + $0x60] sm:$0xff] %v665
        %682 = vst [vmem:[%s198 + $0x68] sm:$0xff] %v666
        %683 = vst [vmem:[%s198 + $0x70] sm:$0xff] %v667
        %684 = vst [vmem:[%s198 + $0x78] sm:$0xff] %v668
        %s685 = sand.u32 %s96, 1
        %s686 = scalar_lea.sflag [#allocation4], %s685
        %s687 = sand.u32 %s96, 1
        %s688 = smul.addr %s687, 128
        %s689 = scalar_lea.vmem [#allocation7], %s688
        // Predicated region
        $region37: #{tpu_custom_call.1} parent=27 // pred_check
          %p690 = pneg %p106
        $region38: #{tpu_custom_call.1} parent=27 // pred_check_branch
          %692 = sbr.rel (%p690) target = $region40
        $region39: #{tpu_custom_call.1} parent=27 // pred_region
          %s693 = smul.u32 16, %s24
          %s695 = ssub.s32 2048, 2048
          %696 = vsyncadd %s686, %s695
          %s697 = smul.addr %s25, 16
          %s698 = sadd.s32 %s693, %s697
          %s699 = smul.addr %s698, 128
          %s700 = scalar_lea.hbm %s2, %s699
          %s702 = sshll.u32 %s689, 4
          %s703 = int_to_ptr.vmem [resolvable:$true] %s702
          %705 = dma.vmem_to_hbm [thread:$0]  %s703, 2048, %s700, %s686
        $region40: #{tpu_custom_call.1} parent=27 // pred_fallthru
          _
      $region28: #{tpu_custom_call.1} parent=5 // pred_fallthru
        _
      %p706 = scmp.le.s32.totalorder 2, %s15
      // Predicated region
      $region41: #{tpu_custom_call.1} parent=5 // pred_check
        %p707 = pneg %p706
      $region42: #{tpu_custom_call.1} parent=5 // pred_check_branch
        %709 = sbr.rel (%p707) target = $region44
      $region43: #{tpu_custom_call.1} parent=5 // pred_region
        %s710 = ssub.s32 %s15, 2
        // Predicated region
        $region45: #{tpu_custom_call.1} parent=43 // pred_check
          %p711 = pneg %p112
        $region46: #{tpu_custom_call.1} parent=43 // pred_check_branch
          %713 = sbr.rel (%p711) target = $region48
        $region47: #{tpu_custom_call.1} parent=43 // pred_region
          %s714 = sand.u32 %s97, 1
          %s715 = scalar_lea.sflag [#allocation4], %s714
          %s716 = sand.u32 %s97, 1
          %s717 = smul.addr %s716, 128
          %s718 = scalar_lea.vmem [#allocation7], %s717
          %719 = dma.done %s715, 2048
        $region48: #{tpu_custom_call.1} parent=43 // pred_fallthru
          _
      $region44: #{tpu_custom_call.1} parent=5 // pred_fallthru
        _
    $region6: #{tpu_custom_call.1} parent=1 // loop_footer
      %s19 = sadd.s32 1, %s15
    $region7: #{tpu_custom_call.1} parent=1 // loop_footer_branch
      %14 = sbr.rel target = $region3
    $region8: #{tpu_custom_call.1} parent=1 // loop_exit
      _
    %720 = vsyncpa [#allocation3], 1
    %s721 = scalar_lea.sflag [#allocation3], 1
    %722 = vsyncpa %s721, 1
    %723 = vsyncpa [#allocation6], 1
    %724 = vsyncpa [#allocation4], 1
    %s725 = scalar_lea.sflag [#allocation4], 1
    %726 = vsyncpa %s725, 1

</llo_original>
